<compile_context>
chip_gen: v6e
topology: v6e:2x2x1
jax: 0.10.0
libtpu: 0.0.40
codegen_flags: <defaults>
</compile_context>

<pallas_src>
import functools

import jax
import jax.numpy as jnp
from jax.experimental import pallas as pl
from jax.experimental.pallas import tpu as pltpu

NUMBER_OF_ACTIONS = 9
EMBEDDING_SIZE = 128


def _round_up(n: int, m: int) -> int:
    return ((n + m - 1) // m) * m


def _largest_aligned_divisor(n: int, cap: int) -> int:
    """Largest multiple of 8 that divides n (n is a multiple of 8) and is <= cap."""
    cap = max(8, min(cap, n))
    cap = (cap // 8) * 8
    for d in range(cap, 7, -8):
        if n % d == 0:
            return d
    return 8


def _choose_batch_tiling(batch: int, block_b: int):
    """Pick (padded_batch, tile_rows) so tile divides padded_batch and padding is minimal."""
    b_pad8 = _round_up(max(batch, 1), 8)
    cap = max(8, (min(block_b, b_pad8) // 8) * 8)
    tb = _largest_aligned_divisor(b_pad8, cap)
    if tb * 4 < cap:
        # Degenerate divisor (e.g. B = 8 * prime): padding to a full tile (one extra
        # output copy) beats hundreds of tiny grid steps at ~0.35 us each.
        tb = cap
        b_pad = _round_up(b_pad8, tb)
    else:
        b_pad = b_pad8
    return b_pad, tb


def _select_rows(xv, table, emb_size):
    """xv: (rows, A) int32; table: (V, E) f32 -> (rows, E) f32 via 9-way cmp+sel (VPU)."""
    rows = xv.shape[0]
    vocab = table.shape[0]
    # Exactly one nonzero per row -> stored value == row sum (9-lane XLU reduce).
    vals = jnp.sum(xv, axis=1, keepdims=True)                     # (rows, 1) int32
    # Broadcast once along lanes so each select is a plain full-vreg cmp + sel.
    vals_b = jnp.broadcast_to(vals, (rows, emb_size))             # (rows, E) int32
    # TODO(synk): values >= V, negative, or all-zero rows silently yield E[0] here,
    # whereas torch.nn.Embedding would raise an index error.
    acc = jnp.broadcast_to(table[0, :], (rows, emb_size))         # default -> E[0]
    for v in range(1, vocab):                                     # unrolled, bit-exact
        acc = jnp.where(vals_b == v, table[v, :], acc)
    return acc


def _action_gather_kernel(x_ref, emb_ref, o_ref, *, inner: int):
    # x_ref:   (TB, A) int32 -- one nonzero per row; stored value = embedding index
    # emb_ref: (V, E)  f32   -- VMEM-resident table (same block every grid step)
    # o_ref:   (TB, E) f32   -- lane-dense output tile
    tb, emb_size = o_ref.shape
    table = emb_ref[...]                                          # (9,128): ~9 vregs

    n_chunks = tb // inner
    if n_chunks == 1:
        o_ref[...] = _select_rows(x_ref[...], table, emb_size)
    else:
        # fori_loop bounds live ranges: each chunk's select chain stays in vregs and
        # stores straight to the output tile (no VMEM round-trips of the accumulator).
        def body(c, carry):
            r0 = pl.multiple_of(c * inner, inner)
            o_ref[pl.ds(r0, inner), :] = _select_rows(
                x_ref[pl.ds(r0, inner), :], table, emb_size
            )
            return carry

        jax.lax.fori_loop(0, n_chunks, body, 0, unroll=False)


def action_network_forward(x, emb_table, *, block_b: int = 2048, inner_rows: int = 256):
    """x: (B, A) int, exactly one nonzero per row; emb_table: (V, E) f32 -> (B, E) f32."""
    batch, num_actions = x.shape
    vocab, emb_size = emb_table.shape

    x = x.astype(jnp.int32)
    emb_table = emb_table.astype(jnp.float32)

    b_pad, tb = _choose_batch_tiling(batch, block_b)
    if b_pad != batch:
        # Padded rows sum to 0 -> E[0]; sliced off below (only taken when B isn't a
        # clean multiple -- the common large-B path needs no pad and no copy).
        x = jnp.pad(x, ((0, b_pad - batch), (0, 0)))
    inner = _largest_aligned_divisor(tb, inner_rows)

    grid = (b_pad // tb,)
    itemsize = 4
    cost = pl.CostEstimate(
        flops=2 * b_pad * vocab * emb_size,          # cmp+sel per element; tiny vs bytes
        transcendentals=0,
        bytes_accessed=(b_pad * num_actions * 4      # x read
                        + vocab * emb_size * itemsize  # table (resident)
                        + b_pad * emb_size * itemsize),  # output write (dominant)
    )

    out = pl.pallas_call(
        functools.partial(_action_gather_kernel, inner=inner),
        out_shape=jax.ShapeDtypeStruct((b_pad, emb_size), jnp.float32),
        grid=grid,
        in_specs=[
            # raw action rows; last dim 9 == full array dim -> legal block
            pl.BlockSpec((tb, num_actions), lambda i: (i, 0)),
            # embedding table: same block every step -> stays resident in VMEM
            pl.BlockSpec((vocab, emb_size), lambda i: (0, 0)),
        ],
        out_specs=pl.BlockSpec((tb, emb_size), lambda i: (i, 0)),
        compiler_params=pltpu.CompilerParams(
            dimension_semantics=("parallel",),
            vmem_limit_bytes=32 * 1024 * 1024,       # safe on v5e/v6e (128 MiB) and v7x (64 MiB)
        ),
        cost_estimate=cost,
    )(x, emb_table)

    return out[:batch] if b_pad != batch else out


def _reference(x, emb_table):
    # Pure-JAX reference of the exact PyTorch semantics (gather by stored value).
    return emb_table[jnp.sum(x.astype(jnp.int32), axis=1)]


if __name__ == "__main__":
    key = jax.random.PRNGKey(0)
    k_emb, k_pos, k_val = jax.random.split(key, 3)

    # Deterministic "nn.Embedding(9, 128)" weight (synthetic init, no checkpoint).
    emb_table = jax.random.normal(
        k_emb, (NUMBER_OF_ACTIONS, EMBEDDING_SIZE), dtype=jnp.float32
    )

    def make_x(batch):
        # Exactly one nonzero per row; the stored value varies (1..8) so the test
        # distinguishes "gather by stored value" from "gather by nonzero position".
        positions = jax.random.randint(k_pos, (batch,), 0, NUMBER_OF_ACTIONS)
        values = jax.random.randint(k_val, (batch,), 1, NUMBER_OF_ACTIONS)
        return (
            jax.nn.one_hot(positions, NUMBER_OF_ACTIONS, dtype=jnp.int32)
            * values[:, None]
        ).astype(jnp.int32)

    configs = [
        # single tile, ragged batch (pad 50 -> 56, slice tail)
        dict(batch=50, block_b=2048, inner_rows=256),
        # multi-step pipelined grid (tb=8, 7 grid steps)
        dict(batch=50, block_b=16, inner_rows=256),
        # multi-chunk inner fori_loop inside one tile (tb=64, inner=16 -> 4 chunks)
        dict(batch=64, block_b=64, inner_rows=16),
    ]

    for cfg in configs:
        x = make_x(cfg["batch"])
        out = action_network_forward(
            x, emb_table, block_b=cfg["block_b"], inner_rows=cfg["inner_rows"]
        )
        out = jax.block_until_ready(out)
        ref = _reference(x, emb_table)
        assert out.shape == (cfg["batch"], EMBEDDING_SIZE), (out.shape, cfg)
        # The select path copies table rows verbatim -> bit-exact vs nn.Embedding gather.
        assert jnp.array_equal(out, ref), f"mismatch vs reference for {cfg}"

    print("KERNEL_OK")
</pallas_src>

<mosaic_0001>
module attributes {stable_mosaic.version = 11 : i64} {
  func.func @_action_gather_kernel(%arg0: i32, %arg1: memref<56x9xi32, #tpu.memory_space<vmem>>, %arg2: memref<9x128xf32, #tpu.memory_space<vmem>>, %arg3: memref<56x128xf32, #tpu.memory_space<vmem>>) attributes {dimension_semantics = [#tpu.dimension_semantics<parallel>], iteration_bounds = array<i64: 1>, scalar_prefetch = 0 : i64, scratch_operands = 0 : i64, tpu.core_type = #tpu.core_type<tc>, window_params = [{transform_indices = @transform_0, window_bounds = array<i64: 56, 9>}, {pipeline_mode = #tpu.pipeline_mode<synchronous>, transform_indices = @transform_1, window_bounds = array<i64: 9, 128>}, {transform_indices = @transform_2, window_bounds = array<i64: 56, 128>}]} {
    %c0 = arith.constant 0 : index
    %c0_0 = arith.constant 0 : index
    %0 = vector.load %arg2[%c0, %c0_0] : memref<9x128xf32, #tpu.memory_space<vmem>>, vector<9x128xf32>
    %c0_1 = arith.constant 0 : index
    %c0_2 = arith.constant 0 : index
    %1 = vector.load %arg1[%c0_1, %c0_2] : memref<56x9xi32, #tpu.memory_space<vmem>>, vector<56x9xi32>
    %cst = arith.constant dense<0> : vector<56xi32>
    %2 = vector.multi_reduction <add>, %1, %cst [1] : vector<56x9xi32> to vector<56xi32>
    %3 = vector.shape_cast %2 : vector<56xi32> to vector<56x1xi32>
    %4 = vector.shape_cast %3 : vector<56x1xi32> to vector<56x1xi32>
    %5 = vector.broadcast %4 : vector<56x1xi32> to vector<56x128xi32>
    %6 = vector.extract_strided_slice %0 {offsets = [0, 0], sizes = [1, 128], strides = [1, 1]} : vector<9x128xf32> to vector<1x128xf32>
    %7 = vector.shape_cast %6 : vector<1x128xf32> to vector<128xf32>
    %8 = vector.shape_cast %7 : vector<128xf32> to vector<1x128xf32>
    %9 = vector.broadcast %8 : vector<1x128xf32> to vector<56x128xf32>
    %c1_i32 = arith.constant 1 : i32
    %10 = vector.broadcast %c1_i32 : i32 to vector<56x128xi32>
    %11 = arith.cmpi eq, %5, %10 : vector<56x128xi32>
    %12 = vector.extract_strided_slice %0 {offsets = [1, 0], sizes = [1, 128], strides = [1, 1]} : vector<9x128xf32> to vector<1x128xf32>
    %13 = vector.shape_cast %12 : vector<1x128xf32> to vector<128xf32>
    %14 = vector.shape_cast %13 : vector<128xf32> to vector<1x128xf32>
    %15 = vector.broadcast %14 : vector<1x128xf32> to vector<56x128xf32>
    %16 = arith.select %11, %15, %9 : vector<56x128xi1>, vector<56x128xf32>
    %c2_i32 = arith.constant 2 : i32
    %17 = vector.broadcast %c2_i32 : i32 to vector<56x128xi32>
    %18 = arith.cmpi eq, %5, %17 : vector<56x128xi32>
    %19 = vector.extract_strided_slice %0 {offsets = [2, 0], sizes = [1, 128], strides = [1, 1]} : vector<9x128xf32> to vector<1x128xf32>
    %20 = vector.shape_cast %19 : vector<1x128xf32> to vector<128xf32>
    %21 = vector.shape_cast %20 : vector<128xf32> to vector<1x128xf32>
    %22 = vector.broadcast %21 : vector<1x128xf32> to vector<56x128xf32>
    %23 = arith.select %18, %22, %16 : vector<56x128xi1>, vector<56x128xf32>
    %c3_i32 = arith.constant 3 : i32
    %24 = vector.broadcast %c3_i32 : i32 to vector<56x128xi32>
    %25 = arith.cmpi eq, %5, %24 : vector<56x128xi32>
    %26 = vector.extract_strided_slice %0 {offsets = [3, 0], sizes = [1, 128], strides = [1, 1]} : vector<9x128xf32> to vector<1x128xf32>
    %27 = vector.shape_cast %26 : vector<1x128xf32> to vector<128xf32>
    %28 = vector.shape_cast %27 : vector<128xf32> to vector<1x128xf32>
    %29 = vector.broadcast %28 : vector<1x128xf32> to vector<56x128xf32>
    %30 = arith.select %25, %29, %23 : vector<56x128xi1>, vector<56x128xf32>
    %c4_i32 = arith.constant 4 : i32
    %31 = vector.broadcast %c4_i32 : i32 to vector<56x128xi32>
    %32 = arith.cmpi eq, %5, %31 : vector<56x128xi32>
    %33 = vector.extract_strided_slice %0 {offsets = [4, 0], sizes = [1, 128], strides = [1, 1]} : vector<9x128xf32> to vector<1x128xf32>
    %34 = vector.shape_cast %33 : vector<1x128xf32> to vector<128xf32>
    %35 = vector.shape_cast %34 : vector<128xf32> to vector<1x128xf32>
    %36 = vector.broadcast %35 : vector<1x128xf32> to vector<56x128xf32>
    %37 = arith.select %32, %36, %30 : vector<56x128xi1>, vector<56x128xf32>
    %c5_i32 = arith.constant 5 : i32
    %38 = vector.broadcast %c5_i32 : i32 to vector<56x128xi32>
    %39 = arith.cmpi eq, %5, %38 : vector<56x128xi32>
    %40 = vector.extract_strided_slice %0 {offsets = [5, 0], sizes = [1, 128], strides = [1, 1]} : vector<9x128xf32> to vector<1x128xf32>
    %41 = vector.shape_cast %40 : vector<1x128xf32> to vector<128xf32>
    %42 = vector.shape_cast %41 : vector<128xf32> to vector<1x128xf32>
    %43 = vector.broadcast %42 : vector<1x128xf32> to vector<56x128xf32>
    %44 = arith.select %39, %43, %37 : vector<56x128xi1>, vector<56x128xf32>
    %c6_i32 = arith.constant 6 : i32
    %45 = vector.broadcast %c6_i32 : i32 to vector<56x128xi32>
    %46 = arith.cmpi eq, %5, %45 : vector<56x128xi32>
    %47 = vector.extract_strided_slice %0 {offsets = [6, 0], sizes = [1, 128], strides = [1, 1]} : vector<9x128xf32> to vector<1x128xf32>
    %48 = vector.shape_cast %47 : vector<1x128xf32> to vector<128xf32>
    %49 = vector.shape_cast %48 : vector<128xf32> to vector<1x128xf32>
    %50 = vector.broadcast %49 : vector<1x128xf32> to vector<56x128xf32>
    %51 = arith.select %46, %50, %44 : vector<56x128xi1>, vector<56x128xf32>
    %c7_i32 = arith.constant 7 : i32
    %52 = vector.broadcast %c7_i32 : i32 to vector<56x128xi32>
    %53 = arith.cmpi eq, %5, %52 : vector<56x128xi32>
    %54 = vector.extract_strided_slice %0 {offsets = [7, 0], sizes = [1, 128], strides = [1, 1]} : vector<9x128xf32> to vector<1x128xf32>
    %55 = vector.shape_cast %54 : vector<1x128xf32> to vector<128xf32>
    %56 = vector.shape_cast %55 : vector<128xf32> to vector<1x128xf32>
    %57 = vector.broadcast %56 : vector<1x128xf32> to vector<56x128xf32>
    %58 = arith.select %53, %57, %51 : vector<56x128xi1>, vector<56x128xf32>
    %c8_i32 = arith.constant 8 : i32
    %59 = vector.broadcast %c8_i32 : i32 to vector<56x128xi32>
    %60 = arith.cmpi eq, %5, %59 : vector<56x128xi32>
    %61 = vector.extract_strided_slice %0 {offsets = [8, 0], sizes = [1, 128], strides = [1, 1]} : vector<9x128xf32> to vector<1x128xf32>
    %62 = vector.shape_cast %61 : vector<1x128xf32> to vector<128xf32>
    %63 = vector.shape_cast %62 : vector<128xf32> to vector<1x128xf32>
    %64 = vector.broadcast %63 : vector<1x128xf32> to vector<56x128xf32>
    %65 = arith.select %60, %64, %58 : vector<56x128xi1>, vector<56x128xf32>
    %c0_3 = arith.constant 0 : index
    %c0_4 = arith.constant 0 : index
    %66 = vector.load %arg3[%c0_3, %c0_4] : memref<56x128xf32, #tpu.memory_space<vmem>>, vector<56x128xf32>
    tpu.vector_store %arg3[%c0_3, %c0_4], %65 {strides = array<i32>} : memref<56x128xf32, #tpu.memory_space<vmem>>, vector<56x128xf32>,
    return
  }
  func.func @transform_0(%arg0: i32) -> (i32, i32) {
    %c0_i32 = arith.constant 0 : i32
    %c0_i32_0 = arith.constant 0 : i32
    return %arg0, %c0_i32 : i32, i32
  }
  func.func @transform_1(%arg0: i32) -> (i32, i32) {
    %c0_i32 = arith.constant 0 : i32
    %c0_i32_0 = arith.constant 0 : i32
    %c0_i32_1 = arith.constant 0 : i32
    return %c0_i32, %c0_i32_0 : i32, i32
  }
  func.func @transform_2(%arg0: i32) -> (i32, i32) {
    %c0_i32 = arith.constant 0 : i32
    %c0_i32_0 = arith.constant 0 : i32
    return %arg0, %c0_i32 : i32, i32
  }
}

</mosaic_0001>

<llo_original>
// kernel: tpu_custom_call.1
$region0: #{tpu_custom_call.1}
  #allocation0 [shape = 'u32[]', space=smem, size = 0x4, offset = 0x4, fixed_abs, tag = 'smem constant byte address 0x4 - core index']
  #allocation1 [shape = 'u32[144,128]{1,0:T(1,128)}', space=vmem, size = 0x12000, scoped, tag = 'internal scratch']
  %s0 = inlined_call_operand.vmem [shape: s32[56,9], index: 0, kind: input, shape index: {}]
  %s1 = inlined_call_operand.vmem [shape: f32[9,128], index: 1, kind: input, shape index: {}]
  %s2 = inlined_call_operand.hbm [shape: f32[56,128], index: 2, kind: output, shape index: {}]
  %s3 = sld [smem:[#allocation0]]
  $region18: #{tpu_custom_call.1} parent=0
    _
  %s5 = ssub.s32 1, %s3
  %s6 = scalar_select 0, %s5, %s3
  $region1: #{tpu_custom_call.1} parent=0
    #allocation2 [shape = 'u8[28672]{0}', space=vmem, size = 0x7000, scoped, tag = 'output window, operand 0, single buffered']
    #allocation3 [shape = 's32[1]{0}', space=sflag, size = 0x4, scoped, tag = 'scoped memory for tpu_custom_call.1']
    %7 = vsyncpa [#allocation3], 0
    // Predicated region
    $region2: #{tpu_custom_call.1} parent=1 // pred_check
      _
    $region3: #{tpu_custom_call.1} parent=1 // pred_check_branch
      %9 = sbr.rel (0) target = $region5
    $region4: #{tpu_custom_call.1} parent=1 // pred_region
      _
    $region5: #{tpu_custom_call.1} parent=1 // pred_fallthru
      _
    // Predicated region
    $region6: #{tpu_custom_call.1} parent=1 // pred_check
      _
    $region7: #{tpu_custom_call.1} parent=1 // pred_check_branch
      %11 = sbr.rel (0) target = $region9
    $region8: #{tpu_custom_call.1} parent=1 // pred_region
      _
    $region9: #{tpu_custom_call.1} parent=1 // pred_fallthru
      _
    %v12 = vld [vmem:[%s1] sm:$0xff]
    %v13 = vld [vmem:[%s1 + $0x8] sm:$0x1]
    %v14 = vld [vmem:[%s0] sm:$0xff]
    %v15 = vld [vmem:[%s0 + $0x8] sm:$0xff]
    %v16 = vld [vmem:[%s0 + $0x10] sm:$0xff]
    %v17 = vld [vmem:[%s0 + $0x18] sm:$0xff]
    %v18 = vld [vmem:[%s0 + $0x20] sm:$0xff]
    %v19 = vld [vmem:[%s0 + $0x28] sm:$0xff]
    %v20 = vld [vmem:[%s0 + $0x30] sm:$0xff]
    %vm21 = vcmask 72704
    %v22 = vsel %vm21, %v14, 0
    %v23 = vand.u32 %v22, 65535
    %v24 = vshrl.u32 %v22, 16
    %v25 = vcvt.s32.f32 %v23
    %v26 = vcvt.s32.f32 %v24
    %27 = vadd.xlane.f32.xlu0 %v25
    %v28 = vpop.xlane.xlu0 %27
    %29 = vadd.xlane.f32.xlu0 %v26
    %v30 = vpop.xlane.xlu0 %29
    %v31 = vcvt.f32.s32 %v28
    %v32 = vcvt.f32.s32 %v30
    %v33 = vshll.u32 %v32, 16
    %v34 = vadd.s32 %v33, %v31
    %v35 = vsel %vm21, %v15, 0
    %v36 = vand.u32 %v35, 65535
    %v37 = vshrl.u32 %v35, 16
    %v38 = vcvt.s32.f32 %v36
    %v39 = vcvt.s32.f32 %v37
    %40 = vadd.xlane.f32.xlu0 %v38
    %v41 = vpop.xlane.xlu0 %40
    %42 = vadd.xlane.f32.xlu0 %v39
    %v43 = vpop.xlane.xlu0 %42
    %v44 = vcvt.f32.s32 %v41
    %v45 = vcvt.f32.s32 %v43
    %v46 = vshll.u32 %v45, 16
    %v47 = vadd.s32 %v46, %v44
    %v48 = vsel %vm21, %v16, 0
    %v49 = vand.u32 %v48, 65535
    %v50 = vshrl.u32 %v48, 16
    %v51 = vcvt.s32.f32 %v49
    %v52 = vcvt.s32.f32 %v50
    %53 = vadd.xlane.f32.xlu0 %v51
    %v54 = vpop.xlane.xlu0 %53
    %55 = vadd.xlane.f32.xlu0 %v52
    %v56 = vpop.xlane.xlu0 %55
    %v57 = vcvt.f32.s32 %v54
    %v58 = vcvt.f32.s32 %v56
    %v59 = vshll.u32 %v58, 16
    %v60 = vadd.s32 %v59, %v57
    %v61 = vsel %vm21, %v17, 0
    %v62 = vand.u32 %v61, 65535
    %v63 = vshrl.u32 %v61, 16
    %v64 = vcvt.s32.f32 %v62
    %v65 = vcvt.s32.f32 %v63
    %66 = vadd.xlane.f32.xlu0 %v64
    %v67 = vpop.xlane.xlu0 %66
    %68 = vadd.xlane.f32.xlu0 %v65
    %v69 = vpop.xlane.xlu0 %68
    %v70 = vcvt.f32.s32 %v67
    %v71 = vcvt.f32.s32 %v69
    %v72 = vshll.u32 %v71, 16
    %v73 = vadd.s32 %v72, %v70
    %v74 = vsel %vm21, %v18, 0
    %v75 = vand.u32 %v74, 65535
    %v76 = vshrl.u32 %v74, 16
    %v77 = vcvt.s32.f32 %v75
    %v78 = vcvt.s32.f32 %v76
    %79 = vadd.xlane.f32.xlu0 %v77
    %v80 = vpop.xlane.xlu0 %79
    %81 = vadd.xlane.f32.xlu0 %v78
    %v82 = vpop.xlane.xlu0 %81
    %v83 = vcvt.f32.s32 %v80
    %v84 = vcvt.f32.s32 %v82
    %v85 = vshll.u32 %v84, 16
    %v86 = vadd.s32 %v85, %v83
    %v87 = vsel %vm21, %v19, 0
    %v88 = vand.u32 %v87, 65535
    %v89 = vshrl.u32 %v87, 16
    %v90 = vcvt.s32.f32 %v88
    %v91 = vcvt.s32.f32 %v89
    %92 = vadd.xlane.f32.xlu0 %v90
    %v93 = vpop.xlane.xlu0 %92
    %94 = vadd.xlane.f32.xlu0 %v91
    %v95 = vpop.xlane.xlu0 %94
    %v96 = vcvt.f32.s32 %v93
    %v97 = vcvt.f32.s32 %v95
    %v98 = vshll.u32 %v97, 16
    %v99 = vadd.s32 %v98, %v96
    %v100 = vsel %vm21, %v20, 0
    %v101 = vand.u32 %v100, 65535
    %v102 = vshrl.u32 %v100, 16
    %v103 = vcvt.s32.f32 %v101
    %v104 = vcvt.s32.f32 %v102
    %105 = vadd.xlane.f32.xlu0 %v103
    %v106 = vpop.xlane.xlu0 %105
    %107 = vadd.xlane.f32.xlu0 %v104
    %v108 = vpop.xlane.xlu0 %107
    %v109 = vcvt.f32.s32 %v106
    %v110 = vcvt.f32.s32 %v108
    %v111 = vshll.u32 %v110, 16
    %v112 = vadd.s32 %v111, %v109
    %v113 = vlaneseq
    %v114 = vshrl.u32 %v113, 7
    %v115 = vsub.s32 0, %v114
    %v116 = vrot.slane %v12, %v115
    %vm117 = vcmp.eq.s32.totalorder %v34, 1
    %vm118 = vcmp.eq.s32.totalorder %v47, 1
    %vm119 = vcmp.eq.s32.totalorder %v60, 1
    %vm120 = vcmp.eq.s32.totalorder %v73, 1
    %vm121 = vcmp.eq.s32.totalorder %v86, 1
    %vm122 = vcmp.eq.s32.totalorder %v99, 1
    %vm123 = vcmp.eq.s32.totalorder %v112, 1
    %v124 = vlaneseq
    %v125 = vshrl.u32 %v124, 7
    %v126 = vsub.s32 1, %v125
    %v127 = vrot.slane %v12, %v126
    %v128 = vsel %vm117, %v127, %v116
    %v129 = vsel %vm118, %v127, %v116
    %v130 = vsel %vm119, %v127, %v116
    %v131 = vsel %vm120, %v127, %v116
    %v132 = vsel %vm121, %v127, %v116
    %v133 = vsel %vm122, %v127, %v116
    %v134 = vsel %vm123, %v127, %v116
    %vm135 = vcmp.eq.s32.totalorder %v34, 2
    %vm136 = vcmp.eq.s32.totalorder %v47, 2
    %vm137 = vcmp.eq.s32.totalorder %v60, 2
    %vm138 = vcmp.eq.s32.totalorder %v73, 2
    %vm139 = vcmp.eq.s32.totalorder %v86, 2
    %vm140 = vcmp.eq.s32.totalorder %v99, 2
    %vm141 = vcmp.eq.s32.totalorder %v112, 2
    %v142 = vlaneseq
    %v143 = vshrl.u32 %v142, 7
    %v144 = vsub.s32 2, %v143
    %v145 = vrot.slane %v12, %v144
    %v146 = vsel %vm135, %v145, %v128
    %v147 = vsel %vm136, %v145, %v129
    %v148 = vsel %vm137, %v145, %v130
    %v149 = vsel %vm138, %v145, %v131
    %v150 = vsel %vm139, %v145, %v132
    %v151 = vsel %vm140, %v145, %v133
    %v152 = vsel %vm141, %v145, %v134
    %vm153 = vcmp.eq.s32.totalorder %v34, 3
    %vm154 = vcmp.eq.s32.totalorder %v47, 3
    %vm155 = vcmp.eq.s32.totalorder %v60, 3
    %vm156 = vcmp.eq.s32.totalorder %v73, 3
    %vm157 = vcmp.eq.s32.totalorder %v86, 3
    %vm158 = vcmp.eq.s32.totalorder %v99, 3
    %vm159 = vcmp.eq.s32.totalorder %v112, 3
    %v160 = vlaneseq
    %v161 = vshrl.u32 %v160, 7
    %v162 = vsub.s32 3, %v161
    %v163 = vrot.slane %v12, %v162
    %v164 = vsel %vm153, %v163, %v146
    %v165 = vsel %vm154, %v163, %v147
    %v166 = vsel %vm155, %v163, %v148
    %v167 = vsel %vm156, %v163, %v149
    %v168 = vsel %vm157, %v163, %v150
    %v169 = vsel %vm158, %v163, %v151
    %v170 = vsel %vm159, %v163, %v152
    %vm171 = vcmp.eq.s32.totalorder %v34, 4
    %vm172 = vcmp.eq.s32.totalorder %v47, 4
    %vm173 = vcmp.eq.s32.totalorder %v60, 4
    %vm174 = vcmp.eq.s32.totalorder %v73, 4
    %vm175 = vcmp.eq.s32.totalorder %v86, 4
    %vm176 = vcmp.eq.s32.totalorder %v99, 4
    %vm177 = vcmp.eq.s32.totalorder %v112, 4
    %v178 = vlaneseq
    %v179 = vshrl.u32 %v178, 7
    %v180 = vsub.s32 4, %v179
    %v181 = vrot.slane %v12, %v180
    %v182 = vsel %vm171, %v181, %v164
    %v183 = vsel %vm172, %v181, %v165
    %v184 = vsel %vm173, %v181, %v166
    %v185 = vsel %vm174, %v181, %v167
    %v186 = vsel %vm175, %v181, %v168
    %v187 = vsel %vm176, %v181, %v169
    %v188 = vsel %vm177, %v181, %v170
    %vm189 = vcmp.eq.s32.totalorder %v34, 5
    %vm190 = vcmp.eq.s32.totalorder %v47, 5
    %vm191 = vcmp.eq.s32.totalorder %v60, 5
    %vm192 = vcmp.eq.s32.totalorder %v73, 5
    %vm193 = vcmp.eq.s32.totalorder %v86, 5
    %vm194 = vcmp.eq.s32.totalorder %v99, 5
    %vm195 = vcmp.eq.s32.totalorder %v112, 5
    %v196 = vlaneseq
    %v197 = vshrl.u32 %v196, 7
    %v198 = vsub.s32 5, %v197
    %v199 = vrot.slane %v12, %v198
    %v200 = vsel %vm189, %v199, %v182
    %v201 = vsel %vm190, %v199, %v183
    %v202 = vsel %vm191, %v199, %v184
    %v203 = vsel %vm192, %v199, %v185
    %v204 = vsel %vm193, %v199, %v186
    %v205 = vsel %vm194, %v199, %v187
    %v206 = vsel %vm195, %v199, %v188
    %vm207 = vcmp.eq.s32.totalorder %v34, 6
    %vm208 = vcmp.eq.s32.totalorder %v47, 6
    %vm209 = vcmp.eq.s32.totalorder %v60, 6
    %vm210 = vcmp.eq.s32.totalorder %v73, 6
    %vm211 = vcmp.eq.s32.totalorder %v86, 6
    %vm212 = vcmp.eq.s32.totalorder %v99, 6
    %vm213 = vcmp.eq.s32.totalorder %v112, 6
    %v214 = vlaneseq
    %v215 = vshrl.u32 %v214, 7
    %v216 = vsub.s32 6, %v215
    %v217 = vrot.slane %v12, %v216
    %v218 = vsel %vm207, %v217, %v200
    %v219 = vsel %vm208, %v217, %v201
    %v220 = vsel %vm209, %v217, %v202
    %v221 = vsel %vm210, %v217, %v203
    %v222 = vsel %vm211, %v217, %v204
    %v223 = vsel %vm212, %v217, %v205
    %v224 = vsel %vm213, %v217, %v206
    %vm225 = vcmp.eq.s32.totalorder %v34, 7
    %vm226 = vcmp.eq.s32.totalorder %v47, 7
    %vm227 = vcmp.eq.s32.totalorder %v60, 7
    %vm228 = vcmp.eq.s32.totalorder %v73, 7
    %vm229 = vcmp.eq.s32.totalorder %v86, 7
    %vm230 = vcmp.eq.s32.totalorder %v99, 7
    %vm231 = vcmp.eq.s32.totalorder %v112, 7
    %v232 = vlaneseq
    %v233 = vshrl.u32 %v232, 7
    %v234 = vsub.s32 7, %v233
    %v235 = vrot.slane %v12, %v234
    %v236 = vsel %vm225, %v235, %v218
    %v237 = vsel %vm226, %v235, %v219
    %v238 = vsel %vm227, %v235, %v220
    %v239 = vsel %vm228, %v235, %v221
    %v240 = vsel %vm229, %v235, %v222
    %v241 = vsel %vm230, %v235, %v223
    %v242 = vsel %vm231, %v235, %v224
    %vm243 = vcmp.eq.s32.totalorder %v34, 8
    %vm244 = vcmp.eq.s32.totalorder %v47, 8
    %vm245 = vcmp.eq.s32.totalorder %v60, 8
    %vm246 = vcmp.eq.s32.totalorder %v73, 8
    %vm247 = vcmp.eq.s32.totalorder %v86, 8
    %vm248 = vcmp.eq.s32.totalorder %v99, 8
    %vm249 = vcmp.eq.s32.totalorder %v112, 8
    %v250 = vlaneseq
    %v251 = vshrl.u32 %v250, 7
    %v252 = vsub.s32 0, %v251
    %v253 = vrot.slane %v13, %v252
    %v254 = vsel %vm243, %v253, %v236
    %v255 = vsel %vm244, %v253, %v237
    %v256 = vsel %vm245, %v253, %v238
    %v257 = vsel %vm246, %v253, %v239
    %v258 = vsel %vm247, %v253, %v240
    %v259 = vsel %vm248, %v253, %v241
    %v260 = vsel %vm249, %v253, %v242
    %261 = vst [vmem:[#allocation2] sm:$0xff] %v254
    %262 = vst [vmem:[#allocation2 + $0x8] sm:$0xff] %v255
    %263 = vst [vmem:[#allocation2 + $0x10] sm:$0xff] %v256
    %264 = vst [vmem:[#allocation2 + $0x18] sm:$0xff] %v257
    %265 = vst [vmem:[#allocation2 + $0x20] sm:$0xff] %v258
    %266 = vst [vmem:[#allocation2 + $0x28] sm:$0xff] %v259
    %267 = vst [vmem:[#allocation2 + $0x30] sm:$0xff] %v260
    // Predicated region
    $region10: #{tpu_custom_call.1} parent=1 // pred_check
      _
    $region11: #{tpu_custom_call.1} parent=1 // pred_check_branch
      %269 = sbr.rel (0) target = $region13
    $region12: #{tpu_custom_call.1} parent=1 // pred_region
      %s271 = ssub.s32 896, 896
      %272 = vsyncadd [#allocation3], %s271
      %s273 = sshll.u32 [#allocation2], 4
      %s274 = int_to_ptr.vmem [resolvable:$true] %s273
      %279 = dma.vmem_to_hbm [thread:$0]  %s274, 896, %s2, [#allocation3], 128, 128, 8
    $region13: #{tpu_custom_call.1} parent=1 // pred_fallthru
      _
    // Predicated region
    $region14: #{tpu_custom_call.1} parent=1 // pred_check
      _
    $region15: #{tpu_custom_call.1} parent=1 // pred_check_branch
      %281 = sbr.rel (0) target = $region17
    $region16: #{tpu_custom_call.1} parent=1 // pred_region
      %282 = dma.done [#allocation3], 896
    $region17: #{tpu_custom_call.1} parent=1 // pred_fallthru
      _
    %283 = vsyncpa [#allocation3], 1

</llo_original>
